<compile_context>
chip_gen: v7x
topology: tpu7x:2x2x1
jax: 0.10.0
libtpu: 0.0.40
codegen_flags: <defaults>
</compile_context>

<pallas_src>
import jax
import jax.numpy as jnp
from jax.experimental import pallas as pl
from jax.experimental.pallas import tpu as pltpu


def fused_linear_kernel(x_ref, w_ref, b_ref, o_ref):
    # x_ref: (tb, 10)  -- native row-major batch tile (features on lanes)
    # w_ref: (1, 10)   -- folded weight row  (W1 @ W2).T
    # b_ref: (1, 1)    -- folded bias        b1 @ W2 + b2
    # o_ref: (tb, 1)
    # VPU broadcast multiply + lane-axis reduce; no MXU for K=10 / N=1.
    y = jnp.sum(x_ref[...] * w_ref[...], axis=1, keepdims=True) + b_ref[...]
    o_ref[...] = y.astype(o_ref.dtype)


def mlp_forward(x, w1, b1, w2, b2, *, tb=8192):
    """x: (B, 10); w1: (10, 5); b1: (1, 5); w2: (5, 1); b2: (1, 1) -> (B, 1)."""
    # Fold the two bias-only linears outside the kernel (tiny, done once).
    w_row = (w1 @ w2).T            # (1, 10)
    b_eff = b1 @ w2 + b2           # (1, 1)

    B, F = x.shape

    if B <= tb:
        # Single block covering the whole array (block dims == array dims is
        # always legal, regardless of (8,128) divisibility).
        tb_eff = B
        n_tiles = 1
    else:
        tb_eff = max(8, (tb // 8) * 8)   # sublane dim must be a multiple of 8
        n_tiles = pl.cdiv(B, tb_eff)     # partial last block is masked by Pallas

    out = pl.pallas_call(
        fused_linear_kernel,
        out_shape=jax.ShapeDtypeStruct((B, 1), x.dtype),
        grid_spec=pltpu.PrefetchScalarGridSpec(
            num_scalar_prefetch=0,
            grid=(n_tiles,),
            in_specs=[
                pl.BlockSpec((tb_eff, F), lambda i: (i, 0)),   # x tile (native layout)
                pl.BlockSpec((1, F), lambda i: (0, 0)),        # folded weight row
                pl.BlockSpec((1, 1), lambda i: (0, 0)),        # folded bias
            ],
            out_specs=pl.BlockSpec((tb_eff, 1), lambda i: (i, 0)),
        ),
        compiler_params=pltpu.CompilerParams(
            dimension_semantics=("parallel",),
            vmem_limit_bytes=48 * 1024 * 1024,
        ),
        cost_estimate=pl.CostEstimate(
            flops=21 * B, transcendentals=0, bytes_accessed=44 * B
        ),
    )(x, w_row, b_eff)

    return out


def init_params(key):
    # nn.Linear shapes: fc_1 weight (5,10)/bias (5,), fc_2 weight (1,5)/bias (1,)
    # stored transposed as (in, out) so y = x @ W + b matches PyTorch's x @ W.T + b.
    k1, k2, k3, k4 = jax.random.split(key, 4)
    bound1 = 1.0 / jnp.sqrt(10.0)
    bound2 = 1.0 / jnp.sqrt(5.0)
    w1 = jax.random.uniform(k1, (10, 5), jnp.float32, -bound1, bound1)
    b1 = jax.random.uniform(k2, (1, 5), jnp.float32, -bound1, bound1)
    w2 = jax.random.uniform(k3, (5, 1), jnp.float32, -bound2, bound2)
    b2 = jax.random.uniform(k4, (1, 1), jnp.float32, -bound2, bound2)
    return w1, b1, w2, b2


if __name__ == "__main__":
    key = jax.random.PRNGKey(0)
    kx1, kx2, kp = jax.random.split(key, 3)
    w1, b1, w2, b2 = init_params(kp)

    # Small case (B=8): single full-array block.
    x_small = jax.random.normal(kx1, (8, 10), jnp.float32)
    out_small = jax.block_until_ready(mlp_forward(x_small, w1, b1, w2, b2))
    ref_small = (x_small @ w1 + b1) @ w2 + b2
    assert out_small.shape == (8, 1)
    assert jnp.allclose(out_small, ref_small, atol=1e-5), "mismatch (B=8)"

    # Non-multiple-of-8 batch, still a single block (block dims == array dims).
    x_mid = jax.random.normal(kx2, (2000, 10), jnp.float32)
    out_mid = jax.block_until_ready(mlp_forward(x_mid, w1, b1, w2, b2))
    ref_mid = (x_mid @ w1 + b1) @ w2 + b2
    assert out_mid.shape == (2000, 1)
    assert jnp.allclose(out_mid, ref_mid, atol=1e-5), "mismatch (B=2000)"

    # Multi-tile case with a forced small tile: 4 grid steps, masked partial
    # last block (no explicit zero padding anywhere).
    out_tiled = jax.block_until_ready(mlp_forward(x_mid, w1, b1, w2, b2, tb=512))
    assert out_tiled.shape == (2000, 1)
    assert jnp.allclose(out_tiled, ref_mid, atol=1e-5), "mismatch (B=2000, tb=512)"

    print("KERNEL_OK")
</pallas_src>

<mosaic_0001>
module attributes {stable_mosaic.version = 11 : i64} {
  func.func @fused_linear_kernel(%arg0: i32, %arg1: memref<8x10xf32, #tpu.memory_space<vmem>>, %arg2: memref<1x10xf32, #tpu.memory_space<vmem>>, %arg3: memref<1x1xf32, #tpu.memory_space<vmem>>, %arg4: memref<8x1xf32, #tpu.memory_space<vmem>>) attributes {dimension_semantics = [#tpu.dimension_semantics<parallel>], iteration_bounds = array<i64: 1>, scalar_prefetch = 0 : i64, scratch_operands = 0 : i64, tpu.core_type = #tpu.core_type<tc>, window_params = [{transform_indices = @transform_0, window_bounds = array<i64: 8, 10>}, {pipeline_mode = #tpu.pipeline_mode<synchronous>, transform_indices = @transform_1, window_bounds = array<i64: 1, 10>}, {pipeline_mode = #tpu.pipeline_mode<synchronous>, transform_indices = @transform_2, window_bounds = array<i64: 1, 1>}, {transform_indices = @transform_3, window_bounds = array<i64: 8, 1>}]} {
    %c0 = arith.constant 0 : index
    %c0_0 = arith.constant 0 : index
    %0 = vector.load %arg1[%c0, %c0_0] : memref<8x10xf32, #tpu.memory_space<vmem>>, vector<8x10xf32>
    %c0_1 = arith.constant 0 : index
    %c0_2 = arith.constant 0 : index
    %1 = vector.load %arg2[%c0_1, %c0_2] : memref<1x10xf32, #tpu.memory_space<vmem>>, vector<1x10xf32>
    %2 = vector.broadcast %1 : vector<1x10xf32> to vector<8x10xf32>
    %3 = arith.mulf %0, %2 : vector<8x10xf32>
    %cst = arith.constant dense<0.000000e+00> : vector<8xf32>
    %4 = vector.multi_reduction <add>, %3, %cst [1] : vector<8x10xf32> to vector<8xf32>
    %5 = vector.shape_cast %4 : vector<8xf32> to vector<8x1xf32>
    %c0_3 = arith.constant 0 : index
    %c0_4 = arith.constant 0 : index
    %6 = vector.load %arg3[%c0_3, %c0_4] : memref<1x1xf32, #tpu.memory_space<vmem>>, vector<1x1xf32>
    %7 = vector.broadcast %6 : vector<1x1xf32> to vector<8x1xf32>
    %8 = arith.addf %5, %7 : vector<8x1xf32>
    %c0_5 = arith.constant 0 : index
    %c0_6 = arith.constant 0 : index
    %9 = vector.load %arg4[%c0_5, %c0_6] : memref<8x1xf32, #tpu.memory_space<vmem>>, vector<8x1xf32>
    tpu.vector_store %arg4[%c0_5, %c0_6], %8 {strides = array<i32>} : memref<8x1xf32, #tpu.memory_space<vmem>>, vector<8x1xf32>,
    return
  }
  func.func @transform_0(%arg0: i32) -> (i32, i32) {
    %c0_i32 = arith.constant 0 : i32
    %c0_i32_0 = arith.constant 0 : i32
    return %arg0, %c0_i32 : i32, i32
  }
  func.func @transform_1(%arg0: i32) -> (i32, i32) {
    %c0_i32 = arith.constant 0 : i32
    %c0_i32_0 = arith.constant 0 : i32
    %c0_i32_1 = arith.constant 0 : i32
    return %c0_i32, %c0_i32_0 : i32, i32
  }
  func.func @transform_2(%arg0: i32) -> (i32, i32) {
    %c0_i32 = arith.constant 0 : i32
    %c0_i32_0 = arith.constant 0 : i32
    %c0_i32_1 = arith.constant 0 : i32
    return %c0_i32, %c0_i32_0 : i32, i32
  }
  func.func @transform_3(%arg0: i32) -> (i32, i32) {
    %c0_i32 = arith.constant 0 : i32
    %c0_i32_0 = arith.constant 0 : i32
    return %arg0, %c0_i32 : i32, i32
  }
}

</mosaic_0001>

<llo_original>
// kernel: tpu_custom_call.1
$region0: #{tpu_custom_call.1}
  #allocation0 [shape = 'u32[]', space=smem, size = 0x4, offset = 0x4, fixed_abs, tag = 'smem constant byte address 0x4 - core index']
  #allocation1 [shape = 'u32[144,128]{1,0:T(1,128)}', space=vmem, size = 0x12000, scoped, tag = 'internal scratch']
  #allocation2 [shape = 'f32[1,1]{1,0:T(1,128)S(1)}', space=vmem, size = 0x200, scoped, tag = 'scoped memory for tpu_custom_call.1']
  %s0 = inlined_call_operand.hbm [shape: f32[8,10], index: 0, kind: input, shape index: {}]
  %s1 = inlined_call_operand.vmem [shape: f32[1,10], index: 1, kind: input, shape index: {}]
  %s2 = inlined_call_operand.<no memory space> [shape: f32[1,1], index: 2, kind: input, shape index: {}]
  %s3 = inlined_call_operand.vmem [shape: f32[8,1], index: 3, kind: output, shape index: {}]
  %s4 = sld [smem:[#allocation0]]
  $region26: #{tpu_custom_call.1} parent=0
    _
  %s6 = ssub.s32 1, %s4
  %s7 = scalar_select 0, %s6, %s4
  %v8 = vstv %s2
  %9 = vst [vmem:[#allocation2] sm:$0x1] %v8
  $region1: #{tpu_custom_call.1} parent=0
    #allocation3 [shape = 'u8[4096]{0}', space=vmem, size = 0x1000, scoped, tag = 'input window, operand 0, single buffered']
    #allocation4 [shape = 's32[1]{0}', space=sflag, size = 0x4, scoped, tag = 'scoped memory for tpu_custom_call.1']
    %10 = vsyncpa [#allocation4], 0
    // Predicated region
    $region2: #{tpu_custom_call.1} parent=1 // pred_check
      _
    $region3: #{tpu_custom_call.1} parent=1 // pred_check_branch
      %12 = sbr.rel (0) target = $region5
    $region4: #{tpu_custom_call.1} parent=1 // pred_region
      %s14 = ssub.s32 128, 128
      %15 = vsyncadd [#allocation4], %s14
      %s17 = sshll.u32 [#allocation3], 4
      %s18 = int_to_ptr.vmem [resolvable:$true] %s17
      %20 = dma.hbm_to_vmem [thread:$0]  %s0, 128, %s18, [#allocation4]
    $region5: #{tpu_custom_call.1} parent=1 // pred_fallthru
      _
    // Predicated region
    $region6: #{tpu_custom_call.1} parent=1 // pred_check
      _
    $region7: #{tpu_custom_call.1} parent=1 // pred_check_branch
      %22 = sbr.rel (0) target = $region9
    $region8: #{tpu_custom_call.1} parent=1 // pred_region
      _
    $region9: #{tpu_custom_call.1} parent=1 // pred_fallthru
      _
    // Predicated region
    $region10: #{tpu_custom_call.1} parent=1 // pred_check
      _
    $region11: #{tpu_custom_call.1} parent=1 // pred_check_branch
      %24 = sbr.rel (0) target = $region13
    $region12: #{tpu_custom_call.1} parent=1 // pred_region
      _
    $region13: #{tpu_custom_call.1} parent=1 // pred_fallthru
      _
    // Predicated region
    $region14: #{tpu_custom_call.1} parent=1 // pred_check
      _
    $region15: #{tpu_custom_call.1} parent=1 // pred_check_branch
      %26 = sbr.rel (0) target = $region17
    $region16: #{tpu_custom_call.1} parent=1 // pred_region
      %27 = dma.done [#allocation4], 128
    $region17: #{tpu_custom_call.1} parent=1 // pred_fallthru
      _
    %v28 = vld [vmem:[#allocation3] sm:$0xff]
    %v29 = vld [vmem:[%s1] sm:$0x1]
    %v31 = vlaneseq
    %v32 = vshrl.u32 %v31, 7
    %v33 = vsub.s32 0, %v32
    %v34 = vrot.slane %v29, %v33
    %v36 = vmul.f32 %v28, %v34
    %vm37 = vcmask 80896
    %v38 = vsel %vm37, %v36, 0.0
    %39 = vadd.xlane.f32.xlu0 %v38
    %v40 = vpop.xlane.xlu0 %39
    %v41 = vld [vmem:[#allocation2] sm:$0x1]
    %v43 = vlaneseq
    %v44 = vshrl.u32 %v43, 7
    %v45 = vsub.s32 0, %v44
    %v46 = vrot.slane %v41, %v45
    %v48 = vadd.f32 %v40, %v46
    %vm49 = vcmask 7168
    %50 = vst.msk [vmem:[%s3] sm:$0xff] %vm49, %v48
    // Predicated region
    $region18: #{tpu_custom_call.1} parent=1 // pred_check
      _
    $region19: #{tpu_custom_call.1} parent=1 // pred_check_branch
      %52 = sbr.rel (0) target = $region21
    $region20: #{tpu_custom_call.1} parent=1 // pred_region
      _
    $region21: #{tpu_custom_call.1} parent=1 // pred_fallthru
      _
    // Predicated region
    $region22: #{tpu_custom_call.1} parent=1 // pred_check
      _
    $region23: #{tpu_custom_call.1} parent=1 // pred_check_branch
      %54 = sbr.rel (0) target = $region25
    $region24: #{tpu_custom_call.1} parent=1 // pred_region
      _
    $region25: #{tpu_custom_call.1} parent=1 // pred_fallthru
      _
    %55 = vsyncpa [#allocation4], 1

</llo_original>
